<compile_context>
chip_gen: v7x
topology: tpu7x:2x2x1
jax: 0.10.0
libtpu: 0.0.40
codegen_flags: <defaults>
</compile_context>

<pallas_src>
import functools
import math

import jax
import jax.numpy as jnp
import numpy as np
from jax.experimental import pallas as pl
from jax.experimental.pallas import tpu as pltpu


def make_divisible(v, divisible_by, min_value=None):
    if min_value is None:
        min_value = divisible_by
    new_v = max(min_value, int(v + divisible_by / 2) // divisible_by * divisible_by)
    if new_v < 0.9 * v:
        new_v += divisible_by
    return new_v


_VMEM_LIMIT = 32 * 1024 * 1024          # scoped-VMEM request; safe on v5e/v6e/v7x
_FUSED_VMEM_BUDGET = 20 * 1024 * 1024   # per-grid-step working-set budget (fused path)


# -----------------------------------------------------------------------------
# Fused single-pass kernel: one batch element per grid step.
# -----------------------------------------------------------------------------
def _se_fused_kernel(x_ref, w1t_ref, b1_ref, w2_ref, b2_ref, o_ref, *, inv_hw):
    # x_ref / o_ref : (1, C, HW) in the native dtype.
    # w1t_ref: (C, Cr) = W1^T,  b1_ref: (1, Cr)
    # w2_ref : (C, Cr) = W2 (PyTorch layout),  b2_ref: (C, 1)
    xs = x_ref[0].astype(jnp.float32)                                   # (C, HW)
    pooled = jnp.sum(xs, axis=-1, keepdims=True) * inv_hw               # (C, 1)
    # conv1x1 #1 + ReLU: h[r] = relu(sum_c W1[r, c] * pooled[c] + b1[r])
    h = jnp.sum(w1t_ref[...] * pooled, axis=0, keepdims=True) + b1_ref[...]
    h = jnp.maximum(h, 0.0)                                             # (1, Cr)
    # conv1x1 #2 + hard-sigmoid: s[c] = sum_r W2[c, r] * h[r] + b2[c]
    s = jnp.sum(w2_ref[...] * h, axis=-1, keepdims=True) + b2_ref[...]  # (C, 1)
    gate = jnp.clip(s * (1.0 / 6.0) + 0.5, 0.0, 1.0)                    # (C, 1)
    o_ref[0] = (xs * gate).astype(o_ref.dtype)


# -----------------------------------------------------------------------------
# Streaming fallback kernels (per-image tensor too big for a single VMEM block).
# -----------------------------------------------------------------------------
def _pool_sum_kernel(x_ref, o_ref):
    # (BR, HW) native dtype -> (BR, 1) f32 spatial sums (accumulate in f32).
    o_ref[...] = jnp.sum(x_ref[...].astype(jnp.float32), axis=-1, keepdims=True)


def _se_fc_kernel(p_ref, w1_ref, b1_ref, w2_ref, b2_ref, s_ref, *, inv_hw):
    # p_ref: (N, C) spatial sums -> (N, C) hard-sigmoid gate.
    pooled = p_ref[...] * inv_hw
    h = jnp.dot(pooled, w1_ref[...], preferred_element_type=jnp.float32)
    h = jnp.maximum(h + b1_ref[...], 0.0)
    s = jnp.dot(h, w2_ref[...], preferred_element_type=jnp.float32) + b2_ref[...]
    s_ref[...] = jnp.clip(s * (1.0 / 6.0) + 0.5, 0.0, 1.0)


def _scale_kernel(x_ref, g_ref, o_ref):
    # x_ref: (BR, HW) native dtype; g_ref: full (padded NC, 1) resident gate.
    br = x_ref.shape[0]
    start = pl.multiple_of(pl.program_id(0) * br, 8)
    gate = g_ref[pl.ds(start, br), :]                                    # (BR, 1)
    o_ref[...] = (x_ref[...].astype(jnp.float32) * gate).astype(o_ref.dtype)


# -----------------------------------------------------------------------------
# Wrapper
# -----------------------------------------------------------------------------
def _row_block(nrows, hw, itemsize, max_block_bytes=2 << 20):
    """Row tile: multiple of 8, ~<=2 MiB per input tile, and (when possible)
    at least two grid steps so v7x's two TensorCores both stream."""
    if nrows <= 8:
        return nrows                                    # full extent -> legal block dim
    by_vmem = max(8, (max_block_bytes // max(1, itemsize * hw)) // 8 * 8)
    by_split = ((nrows + 1) // 2 + 7) // 8 * 8          # >=2 steps for v7x megacore
    br = min(by_vmem, by_split)
    return nrows if br >= nrows else br


def se_forward(params, x_nchw, *, force_streaming=False, donate_x=False):
    n, c, h, w = x_nchw.shape
    hw = h * w
    nc = n * c
    cr = params["w1"].shape[0]
    dtype = x_nchw.dtype
    ibytes = x_nchw.dtype.itemsize
    inv_hw = 1.0 / float(hw)

    w1_pt = params["w1"].reshape(cr, c).astype(jnp.float32)   # (Cr, C)
    w2_pt = params["w2"].reshape(c, cr).astype(jnp.float32)   # (C, Cr)
    b1 = params["b1"].astype(jnp.float32)
    b2 = params["b2"].astype(jnp.float32)

    # ---------------- fused single-pass path (common case) ----------------
    # Per-step working set: double-buffered in/out tiles + ~2 f32 temporaries.
    per_step_bytes = c * hw * (4 * ibytes + 8)
    if (not force_streaming) and per_step_bytes <= _FUSED_VMEM_BUDGET:
        x3 = x_nchw.reshape(n, c, hw)            # contiguous NCHW -> free reshape
        cost = pl.CostEstimate(
            flops=int(4 * nc * hw + 4 * n * c * cr),
            transcendentals=0,
            bytes_accessed=int(2 * nc * hw * ibytes),
        )
        y3 = pl.pallas_call(
            functools.partial(_se_fused_kernel, inv_hw=inv_hw),
            out_shape=jax.ShapeDtypeStruct((n, c, hw), dtype),
            grid=(n,),
            in_specs=[
                pl.BlockSpec((1, c, hw), lambda i: (i, 0, 0)),
                pl.BlockSpec((c, cr), lambda i: (0, 0)),   # W1^T, resident
                pl.BlockSpec((1, cr), lambda i: (0, 0)),   # b1
                pl.BlockSpec((c, cr), lambda i: (0, 0)),   # W2 (PyTorch layout)
                pl.BlockSpec((c, 1), lambda i: (0, 0)),    # b2
            ],
            out_specs=pl.BlockSpec((1, c, hw), lambda i: (i, 0, 0)),
            compiler_params=pltpu.CompilerParams(
                dimension_semantics=("parallel",),
                vmem_limit_bytes=_VMEM_LIMIT),
            cost_estimate=cost,
            input_output_aliases={0: 0} if donate_x else {},
        )(x3, w1_pt.T, b1.reshape(1, cr), w2_pt, b2.reshape(c, 1))
        return y3.reshape(n, c, h, w)

    # ---------------- streaming fallback (x too big for per-image blocks) ----
    x2 = x_nchw.reshape(nc, hw)
    br = _row_block(nc, hw, ibytes)
    grid = (pl.cdiv(nc, br),)
    cpar = pltpu.CompilerParams(dimension_semantics=("parallel",),
                                vmem_limit_bytes=_VMEM_LIMIT)

    # (1) per-(n, c) spatial sums, lane-dense over H*W.
    sums = pl.pallas_call(
        _pool_sum_kernel,
        out_shape=jax.ShapeDtypeStruct((nc, 1), jnp.float32),
        grid=grid,
        in_specs=[pl.BlockSpec((br, hw), lambda i: (i, 0))],
        out_specs=pl.BlockSpec((br, 1), lambda i: (i, 0)),
        compiler_params=cpar,
        cost_estimate=pl.CostEstimate(
            flops=int(nc * hw), transcendentals=0,
            bytes_accessed=int(nc * hw * ibytes + nc * 4)),
    )(x2)

    # (2) tiny FC: mean -> conv1x1 -> ReLU -> conv1x1 -> hard-sigmoid.
    gate = pl.pallas_call(
        functools.partial(_se_fc_kernel, inv_hw=inv_hw),
        out_shape=jax.ShapeDtypeStruct((n, c), jnp.float32),
        grid=(1,),
        in_specs=[
            pl.BlockSpec((n, c), lambda i: (0, 0)),
            pl.BlockSpec((c, cr), lambda i: (0, 0)),
            pl.BlockSpec((1, cr), lambda i: (0, 0)),
            pl.BlockSpec((cr, c), lambda i: (0, 0)),
            pl.BlockSpec((1, c), lambda i: (0, 0)),
        ],
        out_specs=pl.BlockSpec((n, c), lambda i: (0, 0)),
        compiler_params=pltpu.CompilerParams(vmem_limit_bytes=_VMEM_LIMIT),
    )(sums.reshape(n, c), w1_pt.T, b1.reshape(1, cr), w2_pt.T, b2.reshape(1, c))

    # (3) gate multiply; the gate stays VMEM-resident (constant block index).
    nblk = grid[0]
    gate_col = gate.reshape(nc, 1)
    pad = nblk * br - nc
    if pad:                                   # keep the in-kernel ds() in bounds
        gate_col = jnp.pad(gate_col, ((0, pad), (0, 0)))
    y2 = pl.pallas_call(
        _scale_kernel,
        out_shape=jax.ShapeDtypeStruct((nc, hw), dtype),
        grid=grid,
        in_specs=[
            pl.BlockSpec((br, hw), lambda i: (i, 0)),
            pl.BlockSpec((nblk * br, 1), lambda i: (0, 0)),
        ],
        out_specs=pl.BlockSpec((br, hw), lambda i: (i, 0)),
        compiler_params=cpar,
        cost_estimate=pl.CostEstimate(
            flops=int(nc * hw), transcendentals=0,
            bytes_accessed=int(2 * nc * hw * ibytes + nc * 4)),
        input_output_aliases={0: 0} if donate_x else {},
    )(x2, gate_col)
    return y2.reshape(n, c, h, w)


# -----------------------------------------------------------------------------
# Deterministic parameters (PyTorch Conv2d-shaped weights)
# -----------------------------------------------------------------------------
def build_se_params(key, in_c, reduction_ratio=0.25):
    cr = make_divisible(in_c * reduction_ratio, 4)
    k1, k2, k3, k4 = jax.random.split(key, 4)
    w1 = jax.random.normal(k1, (cr, in_c, 1, 1), jnp.float32) / math.sqrt(in_c)
    b1 = 0.05 * jax.random.normal(k2, (cr,), jnp.float32)
    w2 = jax.random.normal(k3, (in_c, cr, 1, 1), jnp.float32) / math.sqrt(cr)
    b2 = 0.05 * jax.random.normal(k4, (in_c,), jnp.float32)
    return {"w1": w1, "b1": b1, "w2": w2, "b2": b2}


def _reference_np(params, x):
    """High-precision numpy reference mirroring the PyTorch SE forward."""
    xf = np.asarray(jax.device_get(x)).astype(np.float64)
    cr, c = params["w1"].shape[0], params["w1"].shape[1]
    w1 = np.asarray(jax.device_get(params["w1"])).astype(np.float64).reshape(cr, c)
    b1 = np.asarray(jax.device_get(params["b1"])).astype(np.float64)
    w2 = np.asarray(jax.device_get(params["w2"])).astype(np.float64).reshape(c, cr)
    b2 = np.asarray(jax.device_get(params["b2"])).astype(np.float64)
    pooled = xf.mean(axis=(2, 3))                                       # (N, C)
    h_act = np.maximum(pooled @ w1.T + b1, 0.0)
    s = np.clip((h_act @ w2.T + b2) / 6.0 + 0.5, 0.0, 1.0)
    return xf * s[:, :, None, None]


if __name__ == "__main__":
    key = jax.random.PRNGKey(0)
    kx, kp = jax.random.split(key)
    N, C, H, W = 2, 32, 16, 16
    x = jax.random.normal(kx, (N, C, H, W), jnp.float32)   # PyTorch NCHW input
    params = build_se_params(kp, C)

    # Fused single-pass path (default dispatch for this size), f32 input.
    fwd = jax.jit(se_forward)
    y = jax.block_until_ready(fwd(params, x))
    y_ref = _reference_np(params, x)
    assert y.shape == x.shape and y.dtype == x.dtype
    assert jnp.all(jnp.isfinite(y))
    assert np.allclose(np.asarray(y, np.float64), y_ref, atol=1e-4, rtol=1e-4)

    # Streaming fallback path (forced) on the same data.
    fwd_stream = jax.jit(functools.partial(se_forward, force_streaming=True))
    y_s = jax.block_until_ready(fwd_stream(params, x))
    assert y_s.shape == x.shape and y_s.dtype == x.dtype
    assert np.allclose(np.asarray(y_s, np.float64), y_ref, atol=2e-3, rtol=2e-3)

    # Native-dtype (bf16) streaming through the fused path: output stays bf16.
    xb = x.astype(jnp.bfloat16)
    yb = jax.block_until_ready(fwd(params, xb))
    assert yb.dtype == jnp.bfloat16 and yb.shape == x.shape
    yb_ref = _reference_np(params, xb)
    assert np.allclose(np.asarray(yb, np.float64), yb_ref, atol=5e-2, rtol=5e-2)

    print("KERNEL_OK")
</pallas_src>

<mosaic_0001>
module attributes {stable_mosaic.version = 11 : i64} {
  func.func @_se_fused_kernel(%arg0: i32, %arg1: memref<1x32x256xf32, #tpu.memory_space<vmem>>, %arg2: memref<32x8xf32, #tpu.memory_space<vmem>>, %arg3: memref<1x8xf32, #tpu.memory_space<vmem>>, %arg4: memref<32x8xf32, #tpu.memory_space<vmem>>, %arg5: memref<32x1xf32, #tpu.memory_space<vmem>>, %arg6: memref<1x32x256xf32, #tpu.memory_space<vmem>>) attributes {dimension_semantics = [#tpu.dimension_semantics<parallel>], iteration_bounds = array<i64: 2>, scalar_prefetch = 0 : i64, scratch_operands = 0 : i64, tpu.core_type = #tpu.core_type<tc>, window_params = [{transform_indices = @transform_0, window_bounds = array<i64: 1, 32, 256>}, {pipeline_mode = #tpu.pipeline_mode<synchronous>, transform_indices = @transform_1, window_bounds = array<i64: 32, 8>}, {pipeline_mode = #tpu.pipeline_mode<synchronous>, transform_indices = @transform_2, window_bounds = array<i64: 1, 8>}, {pipeline_mode = #tpu.pipeline_mode<synchronous>, transform_indices = @transform_3, window_bounds = array<i64: 32, 8>}, {pipeline_mode = #tpu.pipeline_mode<synchronous>, transform_indices = @transform_4, window_bounds = array<i64: 32, 1>}, {transform_indices = @transform_5, window_bounds = array<i64: 1, 32, 256>}]} {
    %c0 = arith.constant 0 : index
    %c0_0 = arith.constant 0 : index
    %c0_1 = arith.constant 0 : index
    %0 = vector.load %arg1[%c0, %c0_0, %c0_1] : memref<1x32x256xf32, #tpu.memory_space<vmem>>, vector<1x32x256xf32>
    %1 = vector.shape_cast %0 : vector<1x32x256xf32> to vector<32x256xf32>
    %cst = arith.constant dense<0.000000e+00> : vector<32xf32>
    %2 = vector.multi_reduction <add>, %1, %cst [1] : vector<32x256xf32> to vector<32xf32>
    %3 = vector.shape_cast %2 : vector<32xf32> to vector<32x1xf32>
    %cst_2 = arith.constant 3.906250e-03 : f32
    %4 = vector.broadcast %cst_2 : f32 to vector<32x1xf32>
    %5 = arith.mulf %3, %4 : vector<32x1xf32>
    %c0_3 = arith.constant 0 : index
    %c0_4 = arith.constant 0 : index
    %6 = vector.load %arg2[%c0_3, %c0_4] : memref<32x8xf32, #tpu.memory_space<vmem>>, vector<32x8xf32>
    %7 = vector.broadcast %5 : vector<32x1xf32> to vector<32x8xf32>
    %8 = arith.mulf %6, %7 : vector<32x8xf32>
    %cst_5 = arith.constant dense<0.000000e+00> : vector<8xf32>
    %9 = vector.multi_reduction <add>, %8, %cst_5 [0] : vector<32x8xf32> to vector<8xf32>
    %10 = vector.shape_cast %9 : vector<8xf32> to vector<1x8xf32>
    %c0_6 = arith.constant 0 : index
    %c0_7 = arith.constant 0 : index
    %11 = vector.load %arg3[%c0_6, %c0_7] : memref<1x8xf32, #tpu.memory_space<vmem>>, vector<1x8xf32>
    %12 = arith.addf %10, %11 : vector<1x8xf32>
    %cst_8 = arith.constant 0.000000e+00 : f32
    %13 = vector.broadcast %cst_8 : f32 to vector<1x8xf32>
    %14 = arith.maximumf %12, %13 : vector<1x8xf32>
    %c0_9 = arith.constant 0 : index
    %c0_10 = arith.constant 0 : index
    %15 = vector.load %arg4[%c0_9, %c0_10] : memref<32x8xf32, #tpu.memory_space<vmem>>, vector<32x8xf32>
    %16 = vector.broadcast %14 : vector<1x8xf32> to vector<32x8xf32>
    %17 = arith.mulf %15, %16 : vector<32x8xf32>
    %cst_11 = arith.constant dense<0.000000e+00> : vector<32xf32>
    %18 = vector.multi_reduction <add>, %17, %cst_11 [1] : vector<32x8xf32> to vector<32xf32>
    %19 = vector.shape_cast %18 : vector<32xf32> to vector<32x1xf32>
    %c0_12 = arith.constant 0 : index
    %c0_13 = arith.constant 0 : index
    %20 = vector.load %arg5[%c0_12, %c0_13] : memref<32x1xf32, #tpu.memory_space<vmem>>, vector<32x1xf32>
    %21 = arith.addf %19, %20 : vector<32x1xf32>
    %cst_14 = arith.constant 0.166666672 : f32
    %22 = vector.broadcast %cst_14 : f32 to vector<32x1xf32>
    %23 = arith.mulf %21, %22 : vector<32x1xf32>
    %cst_15 = arith.constant 5.000000e-01 : f32
    %24 = vector.broadcast %cst_15 : f32 to vector<32x1xf32>
    %25 = arith.addf %23, %24 : vector<32x1xf32>
    %cst_16 = arith.constant 0.000000e+00 : f32
    %cst_17 = arith.constant 1.000000e+00 : f32
    %26 = vector.broadcast %cst_16 : f32 to vector<32x1xf32>
    %27 = arith.maximumf %26, %25 : vector<32x1xf32>
    %28 = vector.broadcast %cst_17 : f32 to vector<32x1xf32>
    %29 = arith.minimumf %28, %27 : vector<32x1xf32>
    %30 = vector.broadcast %29 : vector<32x1xf32> to vector<32x256xf32>
    %31 = arith.mulf %1, %30 : vector<32x256xf32>
    %c0_18 = arith.constant 0 : index
    %c0_19 = arith.constant 0 : index
    %c0_20 = arith.constant 0 : index
    %32 = vector.load %arg6[%c0_18, %c0_19, %c0_20] : memref<1x32x256xf32, #tpu.memory_space<vmem>>, vector<1x32x256xf32>
    %33 = vector.shape_cast %32 : vector<1x32x256xf32> to vector<32x256xf32>
    %34 = vector.shape_cast %31 : vector<32x256xf32> to vector<1x32x256xf32>
    tpu.vector_store %arg6[%c0_18, %c0_19, %c0_20], %34 {strides = array<i32>} : memref<1x32x256xf32, #tpu.memory_space<vmem>>, vector<1x32x256xf32>,
    return
  }
  func.func @transform_0(%arg0: i32) -> (i32, i32, i32) {
    %c0_i32 = arith.constant 0 : i32
    %c0_i32_0 = arith.constant 0 : i32
    %c0_i32_1 = arith.constant 0 : i32
    return %arg0, %c0_i32, %c0_i32_0 : i32, i32, i32
  }
  func.func @transform_1(%arg0: i32) -> (i32, i32) {
    %c0_i32 = arith.constant 0 : i32
    %c0_i32_0 = arith.constant 0 : i32
    %c0_i32_1 = arith.constant 0 : i32
    return %c0_i32, %c0_i32_0 : i32, i32
  }
  func.func @transform_2(%arg0: i32) -> (i32, i32) {
    %c0_i32 = arith.constant 0 : i32
    %c0_i32_0 = arith.constant 0 : i32
    %c0_i32_1 = arith.constant 0 : i32
    return %c0_i32, %c0_i32_0 : i32, i32
  }
  func.func @transform_3(%arg0: i32) -> (i32, i32) {
    %c0_i32 = arith.constant 0 : i32
    %c0_i32_0 = arith.constant 0 : i32
    %c0_i32_1 = arith.constant 0 : i32
    return %c0_i32, %c0_i32_0 : i32, i32
  }
  func.func @transform_4(%arg0: i32) -> (i32, i32) {
    %c0_i32 = arith.constant 0 : i32
    %c0_i32_0 = arith.constant 0 : i32
    %c0_i32_1 = arith.constant 0 : i32
    return %c0_i32, %c0_i32_0 : i32, i32
  }
  func.func @transform_5(%arg0: i32) -> (i32, i32, i32) {
    %c0_i32 = arith.constant 0 : i32
    %c0_i32_0 = arith.constant 0 : i32
    %c0_i32_1 = arith.constant 0 : i32
    return %arg0, %c0_i32, %c0_i32_0 : i32, i32, i32
  }
}

</mosaic_0001>

<llo_original>
// kernel: se_forward.1
$region0: #{se_forward.1}
  #allocation0 [shape = 'u32[]', space=smem, size = 0x4, offset = 0x4, fixed_abs, tag = 'smem constant byte address 0x4 - core index']
  #allocation1 [shape = 'u32[144,128]{1,0:T(1,128)}', space=vmem, size = 0x12000, scoped, tag = 'internal scratch']
  %s0 = inlined_call_operand.vmem [shape: f32[2,32,256], index: 0, kind: input, shape index: {}]
  %s1 = inlined_call_operand.vmem [shape: f32[32,8], index: 1, kind: input, shape index: {}]
  %s2 = inlined_call_operand.vmem [shape: f32[1,8], index: 2, kind: input, shape index: {}]
  %s3 = inlined_call_operand.vmem [shape: f32[32,8], index: 3, kind: input, shape index: {}]
  %s4 = inlined_call_operand.vmem [shape: f32[32,1], index: 4, kind: input, shape index: {}]
  %s5 = inlined_call_operand.vmem [shape: f32[2,32,256], index: 5, kind: output, shape index: {}]
  %s6 = sld [smem:[#allocation0]]
  $region53: #{se_forward.1} parent=0
    _
  %s8 = ssub.s32 1, %s6
  %s9 = scalar_select 0, %s8, %s6
  loop: start=0, step=1, limit=4
  $region2: #{se_forward.1} parent=0 // loop_pre_header
    _
  $region3: #{se_forward.1} parent=0 // loop_header
    %s11 = sphi 0, %s15
    %p12 = scmp.ge.s32.totalorder %s11, 4
    %s21 = sphi 0, %s23
    %s24 = sphi 0, %s21
    %s25 = sphi 0, %s24
    %s41 = sphi 0, %s25
    %s45 = sphi 0, %s45
    %s47 = sphi 0, %s45
    %s48 = sphi 0, %s47
    %s62 = sphi 0, %s48
    %s66 = sphi 0, %s66
    %s68 = sphi 0, %s66
    %s69 = sphi 0, %s68
    %s83 = sphi 0, %s69
    %s87 = sphi 0, %s87
    %s89 = sphi 0, %s87
    %s90 = sphi 0, %s89
    %s104 = sphi 0, %s90
    %s108 = sphi 0, %s108
    %s110 = sphi 0, %s108
    %s111 = sphi 0, %s110
    %s125 = sphi 0, %s111
    %s131 = sphi 0, %s133
    %s134 = sphi 0, %s131
    %s135 = sphi 0, %s134
    %s151 = sphi 0, %s135
  $region4: #{se_forward.1} parent=0 // loop_header_branch
    %14 = sbr.rel (%p12) target = $region8
  $region5: #{se_forward.1} parent=0 // loop_body
    %s16 = ssub.s32 %s11, 1
    %s17 = ssub.s32 %s11, 2
    %s18 = sadd.s32 %s11, 1
    %s19 = ssub.s32 %s11, %s18
    %p20 = scmp.eq.s32.totalorder %s19, 0
    %s22 = sadd.s32 %s21, 1
    %s23 = scalar_select %p20, %s21, %s22
    %p26 = pneg %p20
    %p27 = scmp.eq.s32.totalorder %s11, 1
    %p28 = por %p26, %p27
    %p29 = scmp.ne.s32.totalorder %s21, %s24
    %p30 = scmp.eq.s32.totalorder %s11, 0
    %p31 = por %p29, %p30
    %p32 = scmp.ne.s32.totalorder %s21, %s24
    %p33 = scmp.eq.s32.totalorder %s16, 1
    %p34 = por %p32, %p33
    %p35 = scmp.ne.s32.totalorder %s24, %s25
    %p36 = scmp.eq.s32.totalorder %s16, 0
    %p37 = por %p35, %p36
    %p38 = scmp.ne.s32.totalorder %s24, %s25
    %p39 = scmp.eq.s32.totalorder %s17, 1
    %p40 = por %p38, %p39
    %p42 = scmp.ne.s32.totalorder %s25, %s41
    %p43 = scmp.eq.s32.totalorder %s17, 0
    %p44 = por %p42, %p43
    %s46 = sadd.s32 %s45, 1
    %p49 = scmp.eq.s32.totalorder %s11, 1
    %p50 = scmp.ne.s32.totalorder %s45, %s47
    %p51 = scmp.eq.s32.totalorder %s11, 0
    %p52 = por %p50, %p51
    %p53 = scmp.ne.s32.totalorder %s45, %s47
    %p54 = scmp.eq.s32.totalorder %s16, 1
    %p55 = por %p53, %p54
    %p56 = scmp.ne.s32.totalorder %s47, %s48
    %p57 = scmp.eq.s32.totalorder %s16, 0
    %p58 = por %p56, %p57
    %p59 = scmp.ne.s32.totalorder %s47, %s48
    %p60 = scmp.eq.s32.totalorder %s17, 1
    %p61 = por %p59, %p60
    %p63 = scmp.ne.s32.totalorder %s48, %s62
    %p64 = scmp.eq.s32.totalorder %s17, 0
    %p65 = por %p63, %p64
    %s67 = sadd.s32 %s66, 1
    %p70 = scmp.eq.s32.totalorder %s11, 1
    %p71 = scmp.ne.s32.totalorder %s66, %s68
    %p72 = scmp.eq.s32.totalorder %s11, 0
    %p73 = por %p71, %p72
    %p74 = scmp.ne.s32.totalorder %s66, %s68
    %p75 = scmp.eq.s32.totalorder %s16, 1
    %p76 = por %p74, %p75
    %p77 = scmp.ne.s32.totalorder %s68, %s69
    %p78 = scmp.eq.s32.totalorder %s16, 0
    %p79 = por %p77, %p78
    %p80 = scmp.ne.s32.totalorder %s68, %s69
    %p81 = scmp.eq.s32.totalorder %s17, 1
    %p82 = por %p80, %p81
    %p84 = scmp.ne.s32.totalorder %s69, %s83
    %p85 = scmp.eq.s32.totalorder %s17, 0
    %p86 = por %p84, %p85
    %s88 = sadd.s32 %s87, 1
    %p91 = scmp.eq.s32.totalorder %s11, 1
    %p92 = scmp.ne.s32.totalorder %s87, %s89
    %p93 = scmp.eq.s32.totalorder %s11, 0
    %p94 = por %p92, %p93
    %p95 = scmp.ne.s32.totalorder %s87, %s89
    %p96 = scmp.eq.s32.totalorder %s16, 1
    %p97 = por %p95, %p96
    %p98 = scmp.ne.s32.totalorder %s89, %s90
    %p99 = scmp.eq.s32.totalorder %s16, 0
    %p100 = por %p98, %p99
    %p101 = scmp.ne.s32.totalorder %s89, %s90
    %p102 = scmp.eq.s32.totalorder %s17, 1
    %p103 = por %p101, %p102
    %p105 = scmp.ne.s32.totalorder %s90, %s104
    %p106 = scmp.eq.s32.totalorder %s17, 0
    %p107 = por %p105, %p106
    %s109 = sadd.s32 %s108, 1
    %p112 = scmp.eq.s32.totalorder %s11, 1
    %p113 = scmp.ne.s32.totalorder %s108, %s110
    %p114 = scmp.eq.s32.totalorder %s11, 0
    %p115 = por %p113, %p114
    %p116 = scmp.ne.s32.totalorder %s108, %s110
    %p117 = scmp.eq.s32.totalorder %s16, 1
    %p118 = por %p116, %p117
    %p119 = scmp.ne.s32.totalorder %s110, %s111
    %p120 = scmp.eq.s32.totalorder %s16, 0
    %p121 = por %p119, %p120
    %p122 = scmp.ne.s32.totalorder %s110, %s111
    %p123 = scmp.eq.s32.totalorder %s17, 1
    %p124 = por %p122, %p123
    %p126 = scmp.ne.s32.totalorder %s111, %s125
    %p127 = scmp.eq.s32.totalorder %s17, 0
    %p128 = por %p126, %p127
    %s129 = ssub.s32 %s11, %s18
    %p130 = scmp.eq.s32.totalorder %s129, 0
    %s132 = sadd.s32 %s131, 1
    %s133 = scalar_select %p130, %s131, %s132
    %p136 = pneg %p130
    %p137 = scmp.eq.s32.totalorder %s11, 1
    %p138 = por %p136, %p137
    %p139 = scmp.ne.s32.totalorder %s131, %s134
    %p140 = scmp.eq.s32.totalorder %s11, 0
    %p141 = por %p139, %p140
    %p142 = scmp.ne.s32.totalorder %s131, %s134
    %p143 = scmp.eq.s32.totalorder %s16, 1
    %p144 = por %p142, %p143
    %p145 = scmp.ne.s32.totalorder %s134, %s135
    %p146 = scmp.eq.s32.totalorder %s16, 0
    %p147 = por %p145, %p146
    %p148 = scmp.ne.s32.totalorder %s134, %s135
    %p149 = scmp.eq.s32.totalorder %s17, 1
    %p150 = por %p148, %p149
    %p152 = scmp.ne.s32.totalorder %s135, %s151
    %p153 = scmp.eq.s32.totalorder %s17, 0
    %p154 = por %p152, %p153
    %p155 = scmp.le.s32.totalorder 1, %s11
    %p156 = scmp.lt.s32.totalorder %s11, 3
    %p157 = pnand %p155, %p156
    %p158 = pneg %p157
    // Predicated region
    $region9: #{se_forward.1} parent=5 // pred_check
      _
    $region10: #{se_forward.1} parent=5 // pred_check_branch
      %160 = sbr.rel (%p157) target = $region12
    $region11: #{se_forward.1} parent=5 // pred_region
      %s161 = ssub.s32 %s11, 1
      // Predicated region
      $region13: #{se_forward.1} parent=11 // pred_check
        %p162 = pneg %p58
      $region14: #{se_forward.1} parent=11 // pred_check_branch
        %164 = sbr.rel (%p162) target = $region16
      $region15: #{se_forward.1} parent=11 // pred_region
        _
      $region16: #{se_forward.1} parent=11 // pred_fallthru
        _
      // Predicated region
      $region17: #{se_forward.1} parent=11 // pred_check
        %p165 = pneg %p79
      $region18: #{se_forward.1} parent=11 // pred_check_branch
        %167 = sbr.rel (%p165) target = $region20
      $region19: #{se_forward.1} parent=11 // pred_region
        _
      $region20: #{se_forward.1} parent=11 // pred_fallthru
        _
      // Predicated region
      $region21: #{se_forward.1} parent=11 // pred_check
        %p168 = pneg %p100
      $region22: #{se_forward.1} parent=11 // pred_check_branch
        %170 = sbr.rel (%p168) target = $region24
      $region23: #{se_forward.1} parent=11 // pred_region
        _
      $region24: #{se_forward.1} parent=11 // pred_fallthru
        _
      // Predicated region
      $region25: #{se_forward.1} parent=11 // pred_check
        %p171 = pneg %p121
      $region26: #{se_forward.1} parent=11 // pred_check_branch
        %173 = sbr.rel (%p171) target = $region28
      $region27: #{se_forward.1} parent=11 // pred_region
        _
      $region28: #{se_forward.1} parent=11 // pred_fallthru
        _
    $region12: #{se_forward.1} parent=5 // pred_fallthru
      _
    %p174 = scmp.lt.s32.totalorder %s11, 2
    // Predicated region
    $region29: #{se_forward.1} parent=5 // pred_check
      %p175 = pneg %p174
    $region30: #{se_forward.1} parent=5 // pred_check_branch
      %177 = sbr.rel (%p175) target = $region32
    $region31: #{se_forward.1} parent=5 // pred_region
      // Predicated region
      $region33: #{se_forward.1} parent=31 // pred_check
        %p178 = pneg %p31
      $region34: #{se_forward.1} parent=31 // pred_check_branch
        %180 = sbr.rel (%p178) target = $region36
      $region35: #{se_forward.1} parent=31 // pred_region
        %p181 = scmp.lt.s32.totalorder %s11, 1
        %s182 = scalar_select %p181, %s11, 1
        %s183 = smul.addr %s182, 8
        %s184 = smul.addr %s183, 8
        %s185 = scalar_lea.vmem %s0, %s184
      $region36: #{se_forward.1} parent=31 // pred_fallthru
        _
    $region32: #{se_forward.1} parent=5 // pred_fallthru
      _
    %p186 = scmp.le.s32.totalorder 1, %s11
    %p187 = scmp.lt.s32.totalorder %s11, 3
    %p188 = pnand %p186, %p187
    %p189 = pneg %p188
    // Predicated region
    $region37: #{se_forward.1} parent=5 // pred_check
      _
    $region38: #{se_forward.1} parent=5 // pred_check_branch
      %191 = sbr.rel (%p188) target = $region40
    $region39: #{se_forward.1} parent=5 // pred_region
      %s192 = ssub.s32 %s11, 1
      %p193 = scmp.lt.s32.totalorder %s16, 1
      %s194 = scalar_select %p193, %s16, 1
      %s195 = smul.addr %s194, 8
      %s196 = smul.addr %s195, 8
      %s197 = scalar_lea.vmem %s0, %s196
      %p198 = pneg %p37
      %p199 = pneg %p34
      %p200 = pneg %p58
      %p201 = pneg %p55
      %p202 = pneg %p79
      %p203 = pneg %p76
      %p204 = pneg %p100
      %p205 = pneg %p97
      %p206 = pneg %p121
      %p207 = pneg %p118
      %p208 = pneg %p147
      %p209 = pneg %p144
      %p210 = scmp.lt.s32.totalorder %s16, 1
      %s211 = scalar_select %p210, %s16, 1
      %s212 = smul.addr %s211, 8
      %s213 = smul.addr %s212, 8
      %s214 = scalar_lea.vmem %s5, %s213
      %p215 = scmp.lt.s32.totalorder %s16, 1
      %s216 = scalar_select %p215, %s16, 1
      %s217 = smul.addr %s216, 8
      %s218 = smul.addr %s217, 8
      %s219 = scalar_lea.vmem %s0, %s218
      %p220 = scmp.lt.s32.totalorder %s16, 1
      %s221 = scalar_select %p220, %s16, 1
      %s222 = smul.addr %s221, 8
      %s223 = smul.addr %s222, 8
      %s224 = scalar_lea.vmem %s5, %s223
      %v225 = vld [vmem:[%s219] sm:$0xff]
      %v226 = vld [vmem:[%s219 + $0x8] sm:$0xff]
      %v227 = vld [vmem:[%s219 + $0x10] sm:$0xff]
      %v228 = vld [vmem:[%s219 + $0x18] sm:$0xff]
      %v229 = vld [vmem:[%s219 + $0x20] sm:$0xff]
      %v230 = vld [vmem:[%s219 + $0x28] sm:$0xff]
      %v231 = vld [vmem:[%s219 + $0x30] sm:$0xff]
      %v232 = vld [vmem:[%s219 + $0x38] sm:$0xff]
      %v233 = vadd.f32 %v225, %v226
      %234 = vadd.xlane.f32.xlu0 %v233
      %v235 = vpop.xlane.xlu0 %234
      %v236 = vadd.f32 %v227, %v228
      %237 = vadd.xlane.f32.xlu0 %v236
      %v238 = vpop.xlane.xlu0 %237
      %v239 = vadd.f32 %v229, %v230
      %240 = vadd.xlane.f32.xlu0 %v239
      %v241 = vpop.xlane.xlu0 %240
      %v242 = vadd.f32 %v231, %v232
      %243 = vadd.xlane.f32.xlu0 %v242
      %v244 = vpop.xlane.xlu0 %243
      %v245 = vmul.f32 %v235, 0.00390625
      %v246 = vmul.f32 %v238, 0.00390625
      %v247 = vmul.f32 %v241, 0.00390625
      %v248 = vmul.f32 %v244, 0.00390625
      %v249 = vld [vmem:[%s1] sm:$0xff]
      %v250 = vld [vmem:[%s1 + $0x8] sm:$0xff]
      %v251 = vld [vmem:[%s1 + $0x10] sm:$0xff]
      %v252 = vld [vmem:[%s1 + $0x18] sm:$0xff]
      %v253 = vmul.f32 %v249, %v245
      %v254 = vmul.f32 %v250, %v246
      %v255 = vmul.f32 %v251, %v247
      %v256 = vmul.f32 %v252, %v248
      %vm257 = vcmask 64512
      %v258 = vsel %vm257, %v253, 0.0
      %v259 = vsel %vm257, %v254, 0.0
      %v260 = vadd.f32 %v258, %v259
      %v261 = vsel %vm257, %v255, 0.0
      %v262 = vadd.f32 %v260, %v261
      %v263 = vsel %vm257, %v256, 0.0
      %v264 = vadd.f32 %v262, %v263
      %v265 = vrot.slane %v264, 4
      %v266 = vadd.f32 %v264, %v265
      %v267 = vrot.slane %v266, 2
      %v268 = vadd.f32 %v266, %v267
      %v269 = vrot.slane %v268, 1
      %v270 = vadd.f32 %v268, %v269
      %v271 = vld [vmem:[%s2] sm:$0x1]
      %v272 = vadd.f32 %v270, %v271
      %v273 = vmax.f32 %v272, 0.0
      %v274 = vld [vmem:[%s3] sm:$0xff]
      %v275 = vld [vmem:[%s3 + $0x8] sm:$0xff]
      %v276 = vld [vmem:[%s3 + $0x10] sm:$0xff]
      %v277 = vld [vmem:[%s3 + $0x18] sm:$0xff]
      %v278 = vlaneseq
      %v279 = vshrl.u32 %v278, 7
      %v280 = vsub.s32 0, %v279
      %v281 = vrot.slane %v273, %v280
      %v282 = vmul.f32 %v274, %v281
      %v283 = vmul.f32 %v275, %v281
      %v284 = vmul.f32 %v276, %v281
      %v285 = vmul.f32 %v277, %v281
      %v286 = vsel %vm257, %v282, 0.0
      %287 = vadd.xlane.f32.xlu0 %v286
      %v288 = vpop.xlane.xlu0 %287
      %v289 = vsel %vm257, %v283, 0.0
      %290 = vadd.xlane.f32.xlu0 %v289
      %v291 = vpop.xlane.xlu0 %290
      %v292 = vsel %vm257, %v284, 0.0
      %293 = vadd.xlane.f32.xlu0 %v292
      %v294 = vpop.xlane.xlu0 %293
      %v295 = vsel %vm257, %v285, 0.0
      %296 = vadd.xlane.f32.xlu0 %v295
      %v297 = vpop.xlane.xlu0 %296
      %v298 = vld [vmem:[%s4] sm:$0xff]
      %v299 = vld [vmem:[%s4 + $0x8] sm:$0xff]
      %v300 = vld [vmem:[%s4 + $0x10] sm:$0xff]
      %v301 = vld [vmem:[%s4 + $0x18] sm:$0xff]
      %v302 = vadd.f32 %v288, %v298
      %v303 = vadd.f32 %v291, %v299
      %v304 = vadd.f32 %v294, %v300
      %v305 = vadd.f32 %v297, %v301
      %v306 = vmul.f32 %v302, 0.16666667
      %v307 = vmul.f32 %v303, 0.16666667
      %v308 = vmul.f32 %v304, 0.16666667
      %v309 = vmul.f32 %v305, 0.16666667
      %v310 = vadd.f32 %v306, 0.5
      %v311 = vadd.f32 %v307, 0.5
      %v312 = vadd.f32 %v308, 0.5
      %v313 = vadd.f32 %v309, 0.5
      %v314 = vmax.f32 %v310, 0.0
      %v315 = vmax.f32 %v311, 0.0
      %v316 = vmax.f32 %v312, 0.0
      %v317 = vmax.f32 %v313, 0.0
      %v318 = vmin.f32 %v314, 1.0
      %v319 = vmin.f32 %v315, 1.0
      %v320 = vmin.f32 %v316, 1.0
      %v321 = vmin.f32 %v317, 1.0
      %323 = vset.pattern.permute.xlu0 0
      %324 = vperm.xlu0 %323, %v318
      %v325 = vpop.permute.xlu0 %324
      %328 = vset.pattern.permute.xlu0 0
      %329 = vperm.xlu0 %328, %v319
      %v330 = vpop.permute.xlu0 %329
      %333 = vset.pattern.permute.xlu0 0
      %334 = vperm.xlu0 %333, %v320
      %v335 = vpop.permute.xlu0 %334
      %338 = vset.pattern.permute.xlu0 0
      %339 = vperm.xlu0 %338, %v321
      %v340 = vpop.permute.xlu0 %339
      %v342 = vmul.f32 %v225, %v325
      %v343 = vmul.f32 %v226, %v325
      %v344 = vmul.f32 %v227, %v330
      %v345 = vmul.f32 %v228, %v330
      %v346 = vmul.f32 %v229, %v335
      %v347 = vmul.f32 %v230, %v335
      %v348 = vmul.f32 %v231, %v340
      %v349 = vmul.f32 %v232, %v340
      %350 = vst [vmem:[%s224] sm:$0xff] %v342
      %351 = vst [vmem:[%s224 + $0x8] sm:$0xff] %v343
      %352 = vst [vmem:[%s224 + $0x10] sm:$0xff] %v344
      %353 = vst [vmem:[%s224 + $0x18] sm:$0xff] %v345
      %354 = vst [vmem:[%s224 + $0x20] sm:$0xff] %v346
      %355 = vst [vmem:[%s224 + $0x28] sm:$0xff] %v347
      %356 = vst [vmem:[%s224 + $0x30] sm:$0xff] %v348
      %357 = vst [vmem:[%s224 + $0x38] sm:$0xff] %v349
      %p358 = scmp.lt.s32.totalorder %s16, 1
      %s359 = scalar_select %p358, %s16, 1
      %s360 = smul.addr %s359, 8
      %s361 = smul.addr %s360, 8
      %s362 = scalar_lea.vmem %s5, %s361
      // Predicated region
      $region41: #{se_forward.1} parent=39 // pred_check
        %p363 = pneg %p144
      $region42: #{se_forward.1} parent=39 // pred_check_branch
        %365 = sbr.rel (%p363) target = $region44
      $region43: #{se_forward.1} parent=39 // pred_region
        _
      $region44: #{se_forward.1} parent=39 // pred_fallthru
        _
    $region40: #{se_forward.1} parent=5 // pred_fallthru
      _
    %p366 = scmp.le.s32.totalorder 2, %s11
    // Predicated region
    $region45: #{se_forward.1} parent=5 // pred_check
      %p367 = pneg %p366
    $region46: #{se_forward.1} parent=5 // pred_check_branch
      %369 = sbr.rel (%p367) target = $region48
    $region47: #{se_forward.1} parent=5 // pred_region
      %s370 = ssub.s32 %s11, 2
      // Predicated region
      $region49: #{se_forward.1} parent=47 // pred_check
        %p371 = pneg %p150
      $region50: #{se_forward.1} parent=47 // pred_check_branch
        %373 = sbr.rel (%p371) target = $region52
      $region51: #{se_forward.1} parent=47 // pred_region
        %p374 = scmp.lt.s32.totalorder %s17, 1
        %s375 = scalar_select %p374, %s17, 1
        %s376 = smul.addr %s375, 8
        %s377 = smul.addr %s376, 8
        %s378 = scalar_lea.vmem %s5, %s377
      $region52: #{se_forward.1} parent=47 // pred_fallthru
        _
    $region48: #{se_forward.1} parent=5 // pred_fallthru
      _
  $region6: #{se_forward.1} parent=0 // loop_footer
    %s15 = sadd.s32 1, %s11
  $region7: #{se_forward.1} parent=0 // loop_footer_branch
    %10 = sbr.rel target = $region3
  $region8: #{se_forward.1} parent=0 // loop_exit
    _

</llo_original>
